<compile_context>
chip_gen: v7x
topology: tpu7x:2x2x1
jax: 0.10.0
libtpu: 0.0.40
codegen_flags: <defaults>
</compile_context>

<pallas_src>
import functools

import jax
import jax.numpy as jnp
from jax.experimental import pallas as pl
from jax.experimental.pallas import tpu as pltpu


_VMEM_LIMIT_BYTES = 32 * 1024 * 1024   # scoped-VMEM limit; safe on v7x (64 MiB physical)
_TILE_BUDGET_BYTES = 4 * 1024 * 1024   # per-step (input + output) tile target
_MIN_GRID_STEPS = 8                    # >= 4 pipelined steps per TensorCore on v7x


def _round_up(x, m):
    return (x + m - 1) // m * m


def _round_down(x, m):
    return max(m, x // m * m)


def _sublane_multiple(dtype):
    itemsize = jnp.dtype(dtype).itemsize
    return max(8, 32 // max(1, itemsize))   # f32 -> 8, bf16 -> 16, int8 -> 32


def _pick_block_rows(total_rows, per_row_bytes, multiple):
    """Row-block size for the single grid axis.

    Keeps the per-step tile around _TILE_BUDGET_BYTES (double-buffered
    footprint a few MiB, amortizing the ~0.35us per-step overhead) while
    guaranteeing >= _MIN_GRID_STEPS grid steps (preferably an even count) so
    both v7x TensorCores get overlapped, balanced work.
    """
    if total_rows <= multiple:
        return total_rows
    budget_rows = _round_down(_TILE_BUDGET_BYTES // max(1, per_row_bytes), multiple)
    steps_rows = _round_down(total_rows // _MIN_GRID_STEPS, multiple)
    tr = max(multiple, min(budget_rows, steps_rows))
    tr = min(tr, total_rows)
    # Prefer an even number of grid steps (2-TensorCore load balance on v7x).
    if pl.cdiv(total_rows, tr) % 2 == 1:
        for cand in (tr - multiple, tr - 2 * multiple):
            if cand >= multiple and pl.cdiv(total_rows, cand) % 2 == 0:
                tr = cand
                break
    return tr


# ----------------------------------------------------------------------------
# Kernel: one (TR, W) input tile -> one (TR, S*W*S) lane-dense output tile.
# ----------------------------------------------------------------------------
def _upsample_rows_kernel(x_ref, o_ref, *, scale):
    x = x_ref[...]                                   # (TR, W)
    rows, w = x.shape
    # Nearest along W: lane interleave xw[:, j*S + b] = x[:, j].  This is the
    # broadcast+reshape form of jnp.repeat(x, scale, axis=-1), which is the
    # exact expression that has been verified to lower cleanly on Mosaic.
    # TODO(synk): if pl.lower_as_mlir shows the (TR, W, S) intermediate being
    # materialized (W->sublane, S->lane relayout), switch to the jnp.take
    # lane-gather form suggested in the perf review.
    xw = jnp.broadcast_to(x[:, :, None], (rows, w, scale)).reshape(rows, w * scale)
    # Nearest along H: the S row-copies live contiguously along the lane axis
    # of the flattened output row, so this is a plain lane-axis concatenate
    # followed by a single dense 2-D store (no sublane-strided writeback).
    o_ref[...] = jnp.concatenate([xw] * scale, axis=-1)   # (TR, S*W*S)


def _upsample_nearest_2d(x, scale):
    n, c, h, w = x.shape
    s = scale
    q = n * c * h
    row_out = s * w * s
    itemsize = jnp.dtype(x.dtype).itemsize
    sub = _sublane_multiple(x.dtype)

    # Padded VMEM bytes per kernel row: input tile row + output tile row
    # (lane axes padded to 128; both tiles are 2-D so no sublane padding of S).
    per_row = (_round_up(w, 128) + _round_up(row_out, 128)) * itemsize
    tr = _pick_block_rows(q, per_row, sub)
    grid = (pl.cdiv(q, tr),)

    # TODO(synk): for very small feature maps (S*W*S < 128) the output lane
    # axis is padded; folding k consecutive H-rows per kernel row (any k
    # dividing Q preserves row order) would make it lane-dense but is not
    # implemented here.
    x2 = x.reshape(q, w)   # free view of the contiguous NCHW buffer
    out = pl.pallas_call(
        functools.partial(_upsample_rows_kernel, scale=s),
        out_shape=jax.ShapeDtypeStruct((q, row_out), x.dtype),
        grid_spec=pltpu.PrefetchScalarGridSpec(
            num_scalar_prefetch=0,
            grid=grid,
            in_specs=[pl.BlockSpec((tr, w), lambda i: (i, 0))],
            out_specs=pl.BlockSpec((tr, row_out), lambda i: (i, 0)),
        ),
        compiler_params=pltpu.CompilerParams(
            dimension_semantics=("parallel",),
            vmem_limit_bytes=_VMEM_LIMIT_BYTES,
        ),
        cost_estimate=pl.CostEstimate(
            flops=0,
            transcendentals=0,
            bytes_accessed=(1 + s * s) * q * w * itemsize,
        ),
    )(x2)
    # (Q, S*W*S) -> (N, C, H*S, W*S) is a contiguous (free) view.
    return out.reshape(n, c, h * s, w * s)


# ----------------------------------------------------------------------------
# Public entry point.
# ----------------------------------------------------------------------------
def upsample_nearest(x, scale_factor=2):
    """Nearest-neighbor upsample of an NCHW tensor by an integer scale factor."""
    if x.ndim != 4:
        raise ValueError(f"expected NCHW input, got shape {x.shape}")
    # TODO(synk): non-integer scale factors of f.interpolate are not implemented.
    s = int(scale_factor)
    if s != scale_factor or s < 1:
        raise ValueError("only integer scale factors >= 1 are supported")
    if s == 1:
        return x
    return _upsample_nearest_2d(x, s)


class Upsample:
    """JAX/Pallas equivalent of the PyTorch Upsample wrapper (nearest mode)."""

    def __init__(self, scale_factor=2, mode="nearest"):
        # TODO(synk): only 'nearest' interpolation is implemented; other
        # f.interpolate modes (bilinear, bicubic, ...) are not translated.
        assert mode == "nearest", "only mode='nearest' is supported"
        self.scale_factor = scale_factor
        self.mode = mode

    def __call__(self, x):
        return upsample_nearest(x, self.scale_factor)


if __name__ == "__main__":
    key = jax.random.PRNGKey(0)
    k0, k1, k2 = jax.random.split(key, 3)

    def ref_nearest(x, s):
        return jnp.repeat(jnp.repeat(x, s, axis=2), s, axis=3)

    # 1) Shape implied by the module spec: N=2, C=4, H=W=16, scale 2.
    x = jax.random.normal(k0, (2, 4, 16, 16), dtype=jnp.float32)
    model = Upsample(scale_factor=2, mode="nearest")
    y = jax.block_until_ready(model(x))
    assert y.shape == (2, 4, 32, 32), y.shape
    assert y.dtype == x.dtype
    assert jnp.array_equal(y, ref_nearest(x, 2)), "mismatch (main case)"

    # 2) Q = N*C*H not a multiple of the row block: exercises the partial
    #    last output block (review correctness concern).
    x2 = jax.random.normal(k1, (1, 3, 5, 16), dtype=jnp.float32)
    y2 = jax.block_until_ready(upsample_nearest(x2, 2))
    assert y2.shape == (1, 3, 10, 32), y2.shape
    assert jnp.array_equal(y2, ref_nearest(x2, 2)), "mismatch (partial block)"

    # 3) scale_factor=3: general S (3-way lane interleave + 3 row copies).
    x3 = jax.random.normal(k2, (1, 2, 8, 8), dtype=jnp.float32)
    y3 = jax.block_until_ready(upsample_nearest(x3, 3))
    assert y3.shape == (1, 2, 24, 24), y3.shape
    assert jnp.array_equal(y3, ref_nearest(x3, 3)), "mismatch (scale=3)"

    print("KERNEL_OK")
</pallas_src>

<mosaic_0001>
module attributes {stable_mosaic.version = 11 : i64} {
  func.func @_upsample_rows_kernel(%arg0: i32, %arg1: memref<16x16xf32, #tpu.memory_space<vmem>>, %arg2: memref<16x64xf32, #tpu.memory_space<vmem>>) attributes {dimension_semantics = [#tpu.dimension_semantics<parallel>], iteration_bounds = array<i64: 8>, scalar_prefetch = 0 : i64, scratch_operands = 0 : i64, tpu.core_type = #tpu.core_type<tc>, window_params = [{transform_indices = @transform_0, window_bounds = array<i64: 16, 16>}, {transform_indices = @transform_1, window_bounds = array<i64: 16, 64>}]} {
    %c0 = arith.constant 0 : index
    %c0_0 = arith.constant 0 : index
    %0 = vector.load %arg1[%c0, %c0_0] : memref<16x16xf32, #tpu.memory_space<vmem>>, vector<16x16xf32>
    %1 = vector.shape_cast %0 : vector<16x16xf32> to vector<16x16x1xf32>
    %2 = vector.shape_cast %1 : vector<16x16x1xf32> to vector<16x16x1xf32>
    %3 = vector.broadcast %2 : vector<16x16x1xf32> to vector<16x16x2xf32>
    %4 = vector.shape_cast %3 : vector<16x16x2xf32> to vector<16x32xf32>
    %5 = tpu.concatenate %4, %4 in 1 : vector<16x32xf32>, vector<16x32xf32> -> vector<16x64xf32>
    %c0_1 = arith.constant 0 : index
    %c0_2 = arith.constant 0 : index
    %6 = vector.load %arg2[%c0_1, %c0_2] : memref<16x64xf32, #tpu.memory_space<vmem>>, vector<16x64xf32>
    tpu.vector_store %arg2[%c0_1, %c0_2], %5 {strides = array<i32>} : memref<16x64xf32, #tpu.memory_space<vmem>>, vector<16x64xf32>,
    return
  }
  func.func @transform_0(%arg0: i32) -> (i32, i32) {
    %c0_i32 = arith.constant 0 : i32
    %c0_i32_0 = arith.constant 0 : i32
    return %arg0, %c0_i32 : i32, i32
  }
  func.func @transform_1(%arg0: i32) -> (i32, i32) {
    %c0_i32 = arith.constant 0 : i32
    %c0_i32_0 = arith.constant 0 : i32
    return %arg0, %c0_i32 : i32, i32
  }
}

</mosaic_0001>

<llo_original>
// kernel: tpu_custom_call.1
$region0: #{tpu_custom_call.1}
  #allocation0 [shape = 'u32[]', space=smem, size = 0x4, offset = 0x4, fixed_abs, tag = 'smem constant byte address 0x4 - core index']
  #allocation1 [shape = 'u32[144,128]{1,0:T(1,128)}', space=vmem, size = 0x12000, scoped, tag = 'internal scratch']
  %s0 = inlined_call_operand.vmem [shape: f32[128,16], index: 0, kind: input, shape index: {}]
  %s1 = inlined_call_operand.vmem [shape: f32[128,64], index: 1, kind: output, shape index: {}]
  %s2 = sld [smem:[#allocation0]]
  $region37: #{tpu_custom_call.1} parent=0
    _
  %s4 = ssub.s32 1, %s2
  %s5 = scalar_select 0, %s4, %s2
  loop: start=0, step=1, limit=10
  $region2: #{tpu_custom_call.1} parent=0 // loop_pre_header
    _
  $region3: #{tpu_custom_call.1} parent=0 // loop_header
    %s7 = sphi 0, %s11
    %p8 = scmp.ge.s32.totalorder %s7, 10
    %s17 = sphi 0, %s19
    %s20 = sphi 0, %s17
    %s21 = sphi 0, %s20
    %s37 = sphi 0, %s21
    %s43 = sphi 0, %s45
    %s46 = sphi 0, %s43
    %s47 = sphi 0, %s46
    %s63 = sphi 0, %s47
  $region4: #{tpu_custom_call.1} parent=0 // loop_header_branch
    %10 = sbr.rel (%p8) target = $region8
  $region5: #{tpu_custom_call.1} parent=0 // loop_body
    %s12 = ssub.s32 %s7, 1
    %s13 = ssub.s32 %s7, 2
    %s14 = sadd.s32 %s7, 1
    %s15 = ssub.s32 %s7, %s14
    %p16 = scmp.eq.s32.totalorder %s15, 0
    %s18 = sadd.s32 %s17, 1
    %s19 = scalar_select %p16, %s17, %s18
    %p22 = pneg %p16
    %p23 = scmp.eq.s32.totalorder %s7, 7
    %p24 = por %p22, %p23
    %p25 = scmp.ne.s32.totalorder %s17, %s20
    %p26 = scmp.eq.s32.totalorder %s7, 0
    %p27 = por %p25, %p26
    %p28 = scmp.ne.s32.totalorder %s17, %s20
    %p29 = scmp.eq.s32.totalorder %s12, 7
    %p30 = por %p28, %p29
    %p31 = scmp.ne.s32.totalorder %s20, %s21
    %p32 = scmp.eq.s32.totalorder %s12, 0
    %p33 = por %p31, %p32
    %p34 = scmp.ne.s32.totalorder %s20, %s21
    %p35 = scmp.eq.s32.totalorder %s13, 7
    %p36 = por %p34, %p35
    %p38 = scmp.ne.s32.totalorder %s21, %s37
    %p39 = scmp.eq.s32.totalorder %s13, 0
    %p40 = por %p38, %p39
    %s41 = ssub.s32 %s7, %s14
    %p42 = scmp.eq.s32.totalorder %s41, 0
    %s44 = sadd.s32 %s43, 1
    %s45 = scalar_select %p42, %s43, %s44
    %p48 = pneg %p42
    %p49 = scmp.eq.s32.totalorder %s7, 7
    %p50 = por %p48, %p49
    %p51 = scmp.ne.s32.totalorder %s43, %s46
    %p52 = scmp.eq.s32.totalorder %s7, 0
    %p53 = por %p51, %p52
    %p54 = scmp.ne.s32.totalorder %s43, %s46
    %p55 = scmp.eq.s32.totalorder %s12, 7
    %p56 = por %p54, %p55
    %p57 = scmp.ne.s32.totalorder %s46, %s47
    %p58 = scmp.eq.s32.totalorder %s12, 0
    %p59 = por %p57, %p58
    %p60 = scmp.ne.s32.totalorder %s46, %s47
    %p61 = scmp.eq.s32.totalorder %s13, 7
    %p62 = por %p60, %p61
    %p64 = scmp.ne.s32.totalorder %s47, %s63
    %p65 = scmp.eq.s32.totalorder %s13, 0
    %p66 = por %p64, %p65
    %p67 = scmp.le.s32.totalorder 1, %s7
    %p68 = scmp.lt.s32.totalorder %s7, 9
    %p69 = pnand %p67, %p68
    %p70 = pneg %p69
    // Predicated region
    $region9: #{tpu_custom_call.1} parent=5 // pred_check
      _
    $region10: #{tpu_custom_call.1} parent=5 // pred_check_branch
      %72 = sbr.rel (%p69) target = $region12
    $region11: #{tpu_custom_call.1} parent=5 // pred_region
      %s73 = ssub.s32 %s7, 1
    $region12: #{tpu_custom_call.1} parent=5 // pred_fallthru
      _
    %p74 = scmp.lt.s32.totalorder %s7, 8
    // Predicated region
    $region13: #{tpu_custom_call.1} parent=5 // pred_check
      %p75 = pneg %p74
    $region14: #{tpu_custom_call.1} parent=5 // pred_check_branch
      %77 = sbr.rel (%p75) target = $region16
    $region15: #{tpu_custom_call.1} parent=5 // pred_region
      // Predicated region
      $region17: #{tpu_custom_call.1} parent=15 // pred_check
        %p78 = pneg %p27
      $region18: #{tpu_custom_call.1} parent=15 // pred_check_branch
        %80 = sbr.rel (%p78) target = $region20
      $region19: #{tpu_custom_call.1} parent=15 // pred_region
        %s81 = smul.u32 2, %s7
        %p82 = scmp.lt.s32.totalorder %s81, 15
        %s83 = scalar_select %p82, %s81, 15
        %s84 = smul.addr %s83, 8
        %s85 = scalar_lea.vmem %s0, %s84
        %s86 = smul.u32 2, %s7
      $region20: #{tpu_custom_call.1} parent=15 // pred_fallthru
        _
    $region16: #{tpu_custom_call.1} parent=5 // pred_fallthru
      _
    %p87 = scmp.le.s32.totalorder 1, %s7
    %p88 = scmp.lt.s32.totalorder %s7, 9
    %p89 = pnand %p87, %p88
    %p90 = pneg %p89
    // Predicated region
    $region21: #{tpu_custom_call.1} parent=5 // pred_check
      _
    $region22: #{tpu_custom_call.1} parent=5 // pred_check_branch
      %92 = sbr.rel (%p89) target = $region24
    $region23: #{tpu_custom_call.1} parent=5 // pred_region
      %s93 = ssub.s32 %s7, 1
      %s94 = smul.u32 2, %s12
      %p95 = scmp.lt.s32.totalorder %s94, 15
      %s96 = scalar_select %p95, %s94, 15
      %s97 = smul.addr %s96, 8
      %s98 = scalar_lea.vmem %s0, %s97
      %p99 = pneg %p33
      %p100 = pneg %p30
      %p101 = pneg %p59
      %p102 = pneg %p56
      %s103 = smul.u32 2, %s12
      %p104 = scmp.lt.s32.totalorder %s103, 15
      %s105 = scalar_select %p104, %s103, 15
      %s106 = smul.addr %s105, 8
      %s107 = scalar_lea.vmem %s1, %s106
      %s108 = smul.u32 2, %s12
      %p109 = scmp.lt.s32.totalorder %s108, 15
      %s110 = scalar_select %p109, %s108, 15
      %s111 = smul.addr %s110, 8
      %s112 = scalar_lea.vmem %s0, %s111
      %s113 = smul.u32 2, %s12
      %s114 = smul.u32 2, %s12
      %p115 = scmp.lt.s32.totalorder %s114, 15
      %s116 = scalar_select %p115, %s114, 15
      %s117 = smul.addr %s116, 8
      %s118 = scalar_lea.vmem %s1, %s117
      %s119 = smul.u32 2, %s12
      %v120 = vld [vmem:[%s112] sm:$0xff]
      %v121 = vld [vmem:[%s112 + $0x8] sm:$0xff]
      %v122 = vlaneseq
      %v123 = vshrl.u32 %v122, 7
      %v124 = vsub.s32 0, %v123
      %v125 = vrot.slane %v120, %v124
      %127 = vbcast.lane.b32.xlu0 %v125, 256
      %v128 = vpop.permute.xlu0 %127
      %s130 = sor.u32 256, 8
      %131 = vbcast.lane.b32.xlu0 %v125, %s130
      %v132 = vpop.permute.xlu0 %131
      %v133 = vlaneseq
      %v134 = vshrl.u32 %v133, 7
      %v135 = vsub.s32 1, %v134
      %v136 = vrot.slane %v120, %v135
      %138 = vbcast.lane.b32.xlu0 %v136, 256
      %v139 = vpop.permute.xlu0 %138
      %s141 = sor.u32 256, 8
      %142 = vbcast.lane.b32.xlu0 %v136, %s141
      %v143 = vpop.permute.xlu0 %142
      %v144 = vlaneseq
      %v145 = vshrl.u32 %v144, 7
      %v146 = vsub.s32 2, %v145
      %v147 = vrot.slane %v120, %v146
      %149 = vbcast.lane.b32.xlu0 %v147, 256
      %v150 = vpop.permute.xlu0 %149
      %s152 = sor.u32 256, 8
      %153 = vbcast.lane.b32.xlu0 %v147, %s152
      %v154 = vpop.permute.xlu0 %153
      %v155 = vlaneseq
      %v156 = vshrl.u32 %v155, 7
      %v157 = vsub.s32 3, %v156
      %v158 = vrot.slane %v120, %v157
      %160 = vbcast.lane.b32.xlu0 %v158, 256
      %v161 = vpop.permute.xlu0 %160
      %s163 = sor.u32 256, 8
      %164 = vbcast.lane.b32.xlu0 %v158, %s163
      %v165 = vpop.permute.xlu0 %164
      %v166 = vlaneseq
      %v167 = vshrl.u32 %v166, 7
      %v168 = vsub.s32 4, %v167
      %v169 = vrot.slane %v120, %v168
      %171 = vbcast.lane.b32.xlu0 %v169, 256
      %v172 = vpop.permute.xlu0 %171
      %s174 = sor.u32 256, 8
      %175 = vbcast.lane.b32.xlu0 %v169, %s174
      %v176 = vpop.permute.xlu0 %175
      %v177 = vlaneseq
      %v178 = vshrl.u32 %v177, 7
      %v179 = vsub.s32 5, %v178
      %v180 = vrot.slane %v120, %v179
      %182 = vbcast.lane.b32.xlu0 %v180, 256
      %v183 = vpop.permute.xlu0 %182
      %s185 = sor.u32 256, 8
      %186 = vbcast.lane.b32.xlu0 %v180, %s185
      %v187 = vpop.permute.xlu0 %186
      %v188 = vlaneseq
      %v189 = vshrl.u32 %v188, 7
      %v190 = vsub.s32 6, %v189
      %v191 = vrot.slane %v120, %v190
      %193 = vbcast.lane.b32.xlu0 %v191, 256
      %v194 = vpop.permute.xlu0 %193
      %s196 = sor.u32 256, 8
      %197 = vbcast.lane.b32.xlu0 %v191, %s196
      %v198 = vpop.permute.xlu0 %197
      %v199 = vlaneseq
      %v200 = vshrl.u32 %v199, 7
      %v201 = vsub.s32 7, %v200
      %v202 = vrot.slane %v120, %v201
      %204 = vbcast.lane.b32.xlu0 %v202, 256
      %v205 = vpop.permute.xlu0 %204
      %s207 = sor.u32 256, 8
      %208 = vbcast.lane.b32.xlu0 %v202, %s207
      %v209 = vpop.permute.xlu0 %208
      %v210 = vlaneseq
      %v211 = vshrl.u32 %v210, 7
      %v212 = vsub.s32 0, %v211
      %v213 = vrot.slane %v121, %v212
      %215 = vbcast.lane.b32.xlu0 %v213, 256
      %v216 = vpop.permute.xlu0 %215
      %s218 = sor.u32 256, 8
      %219 = vbcast.lane.b32.xlu0 %v213, %s218
      %v220 = vpop.permute.xlu0 %219
      %v221 = vlaneseq
      %v222 = vshrl.u32 %v221, 7
      %v223 = vsub.s32 1, %v222
      %v224 = vrot.slane %v121, %v223
      %226 = vbcast.lane.b32.xlu0 %v224, 256
      %v227 = vpop.permute.xlu0 %226
      %s229 = sor.u32 256, 8
      %230 = vbcast.lane.b32.xlu0 %v224, %s229
      %v231 = vpop.permute.xlu0 %230
      %v232 = vlaneseq
      %v233 = vshrl.u32 %v232, 7
      %v234 = vsub.s32 2, %v233
      %v235 = vrot.slane %v121, %v234
      %237 = vbcast.lane.b32.xlu0 %v235, 256
      %v238 = vpop.permute.xlu0 %237
      %s240 = sor.u32 256, 8
      %241 = vbcast.lane.b32.xlu0 %v235, %s240
      %v242 = vpop.permute.xlu0 %241
      %v243 = vlaneseq
      %v244 = vshrl.u32 %v243, 7
      %v245 = vsub.s32 3, %v244
      %v246 = vrot.slane %v121, %v245
      %248 = vbcast.lane.b32.xlu0 %v246, 256
      %v249 = vpop.permute.xlu0 %248
      %s251 = sor.u32 256, 8
      %252 = vbcast.lane.b32.xlu0 %v246, %s251
      %v253 = vpop.permute.xlu0 %252
      %v254 = vlaneseq
      %v255 = vshrl.u32 %v254, 7
      %v256 = vsub.s32 4, %v255
      %v257 = vrot.slane %v121, %v256
      %259 = vbcast.lane.b32.xlu0 %v257, 256
      %v260 = vpop.permute.xlu0 %259
      %s262 = sor.u32 256, 8
      %263 = vbcast.lane.b32.xlu0 %v257, %s262
      %v264 = vpop.permute.xlu0 %263
      %v265 = vlaneseq
      %v266 = vshrl.u32 %v265, 7
      %v267 = vsub.s32 5, %v266
      %v268 = vrot.slane %v121, %v267
      %270 = vbcast.lane.b32.xlu0 %v268, 256
      %v271 = vpop.permute.xlu0 %270
      %s273 = sor.u32 256, 8
      %274 = vbcast.lane.b32.xlu0 %v268, %s273
      %v275 = vpop.permute.xlu0 %274
      %v276 = vlaneseq
      %v277 = vshrl.u32 %v276, 7
      %v278 = vsub.s32 6, %v277
      %v279 = vrot.slane %v121, %v278
      %281 = vbcast.lane.b32.xlu0 %v279, 256
      %v282 = vpop.permute.xlu0 %281
      %s284 = sor.u32 256, 8
      %285 = vbcast.lane.b32.xlu0 %v279, %s284
      %v286 = vpop.permute.xlu0 %285
      %v287 = vlaneseq
      %v288 = vshrl.u32 %v287, 7
      %v289 = vsub.s32 7, %v288
      %v290 = vrot.slane %v121, %v289
      %292 = vbcast.lane.b32.xlu0 %v290, 256
      %v293 = vpop.permute.xlu0 %292
      %s295 = sor.u32 256, 8
      %296 = vbcast.lane.b32.xlu0 %v290, %s295
      %v297 = vpop.permute.xlu0 %296
      %v298 = vcombine.low %v128, %v150
      %v299 = vcombine.high %v128, %v150
      %v301 = vunpack.c.l.s4 1983009808
      %v302 = vunpack.c.0.s8 %v301
      %v303 = vlaneseq
      %v304 = vshrl.u32 %v303, 7
      %v305 = vsub.s32 %v302, %v304
      %v306 = vrot.slane %v298, %v305
      %v308 = vunpack.c.l.s4 1983009808
      %v309 = vunpack.c.0.s8 %v308
      %v310 = vlaneseq
      %v311 = vshrl.u32 %v310, 7
      %v312 = vsub.s32 %v309, %v311
      %v313 = vrot.slane %v299, %v312
      %v314 = vcombine.low %v139, %v161
      %v315 = vcombine.high %v139, %v161
      %v317 = vunpack.c.l.s4 1983009808
      %v318 = vunpack.c.0.s8 %v317
      %v319 = vlaneseq
      %v320 = vshrl.u32 %v319, 7
      %v321 = vsub.s32 %v318, %v320
      %v322 = vrot.slane %v314, %v321
      %v324 = vunpack.c.l.s4 1983009808
      %v325 = vunpack.c.0.s8 %v324
      %v326 = vlaneseq
      %v327 = vshrl.u32 %v326, 7
      %v328 = vsub.s32 %v325, %v327
      %v329 = vrot.slane %v315, %v328
      %v330 = vcombine.low %v172, %v194
      %v331 = vcombine.high %v172, %v194
      %v333 = vunpack.c.l.s4 1983009808
      %v334 = vunpack.c.0.s8 %v333
      %v335 = vlaneseq
      %v336 = vshrl.u32 %v335, 7
      %v337 = vsub.s32 %v334, %v336
      %v338 = vrot.slane %v330, %v337
      %v340 = vunpack.c.l.s4 1983009808
      %v341 = vunpack.c.0.s8 %v340
      %v342 = vlaneseq
      %v343 = vshrl.u32 %v342, 7
      %v344 = vsub.s32 %v341, %v343
      %v345 = vrot.slane %v331, %v344
      %v346 = vcombine.low %v183, %v205
      %v347 = vcombine.high %v183, %v205
      %v349 = vunpack.c.l.s4 1983009808
      %v350 = vunpack.c.0.s8 %v349
      %v351 = vlaneseq
      %v352 = vshrl.u32 %v351, 7
      %v353 = vsub.s32 %v350, %v352
      %v354 = vrot.slane %v346, %v353
      %v356 = vunpack.c.l.s4 1983009808
      %v357 = vunpack.c.0.s8 %v356
      %v358 = vlaneseq
      %v359 = vshrl.u32 %v358, 7
      %v360 = vsub.s32 %v357, %v359
      %v361 = vrot.slane %v347, %v360
      %v362 = vcombine.low %v306, %v322
      %v363 = vcombine.high %v306, %v322
      %v365 = vunpack.c.l.s4 1934713408
      %v366 = vunpack.c.0.s8 %v365
      %v367 = vlaneseq
      %v368 = vshrl.u32 %v367, 7
      %v369 = vsub.s32 %v366, %v368
      %v370 = vrot.slane %v362, %v369
      %v372 = vunpack.c.l.s4 1934713408
      %v373 = vunpack.c.0.s8 %v372
      %v374 = vlaneseq
      %v375 = vshrl.u32 %v374, 7
      %v376 = vsub.s32 %v373, %v375
      %v377 = vrot.slane %v363, %v376
      %v378 = vcombine.low %v313, %v329
      %v379 = vcombine.high %v313, %v329
      %v381 = vunpack.c.l.s4 1934713408
      %v382 = vunpack.c.0.s8 %v381
      %v383 = vlaneseq
      %v384 = vshrl.u32 %v383, 7
      %v385 = vsub.s32 %v382, %v384
      %v386 = vrot.slane %v378, %v385
      %v388 = vunpack.c.l.s4 1934713408
      %v389 = vunpack.c.0.s8 %v388
      %v390 = vlaneseq
      %v391 = vshrl.u32 %v390, 7
      %v392 = vsub.s32 %v389, %v391
      %v393 = vrot.slane %v379, %v392
      %v394 = vcombine.low %v338, %v354
      %v395 = vcombine.high %v338, %v354
      %v397 = vunpack.c.l.s4 1934713408
      %v398 = vunpack.c.0.s8 %v397
      %v399 = vlaneseq
      %v400 = vshrl.u32 %v399, 7
      %v401 = vsub.s32 %v398, %v400
      %v402 = vrot.slane %v394, %v401
      %v404 = vunpack.c.l.s4 1934713408
      %v405 = vunpack.c.0.s8 %v404
      %v406 = vlaneseq
      %v407 = vshrl.u32 %v406, 7
      %v408 = vsub.s32 %v405, %v407
      %v409 = vrot.slane %v395, %v408
      %v410 = vcombine.low %v345, %v361
      %v411 = vcombine.high %v345, %v361
      %v413 = vunpack.c.l.s4 1934713408
      %v414 = vunpack.c.0.s8 %v413
      %v415 = vlaneseq
      %v416 = vshrl.u32 %v415, 7
      %v417 = vsub.s32 %v414, %v416
      %v418 = vrot.slane %v410, %v417
      %v420 = vunpack.c.l.s4 1934713408
      %v421 = vunpack.c.0.s8 %v420
      %v422 = vlaneseq
      %v423 = vshrl.u32 %v422, 7
      %v424 = vsub.s32 %v421, %v423
      %v425 = vrot.slane %v411, %v424
      %v426 = vcombine.low %v370, %v402
      %v427 = vcombine.high %v370, %v402
      %v428 = vcombine.low %v377, %v409
      %v429 = vcombine.high %v377, %v409
      %v430 = vcombine.low %v386, %v418
      %v431 = vcombine.high %v386, %v418
      %v432 = vcombine.low %v393, %v425
      %v433 = vcombine.high %v393, %v425
      %v434 = vcombine.low %v216, %v238
      %v435 = vcombine.high %v216, %v238
      %v437 = vunpack.c.l.s4 1983009808
      %v438 = vunpack.c.0.s8 %v437
      %v439 = vlaneseq
      %v440 = vshrl.u32 %v439, 7
      %v441 = vsub.s32 %v438, %v440
      %v442 = vrot.slane %v434, %v441
      %v444 = vunpack.c.l.s4 1983009808
      %v445 = vunpack.c.0.s8 %v444
      %v446 = vlaneseq
      %v447 = vshrl.u32 %v446, 7
      %v448 = vsub.s32 %v445, %v447
      %v449 = vrot.slane %v435, %v448
      %v450 = vcombine.low %v227, %v249
      %v451 = vcombine.high %v227, %v249
      %v453 = vunpack.c.l.s4 1983009808
      %v454 = vunpack.c.0.s8 %v453
      %v455 = vlaneseq
      %v456 = vshrl.u32 %v455, 7
      %v457 = vsub.s32 %v454, %v456
      %v458 = vrot.slane %v450, %v457
      %v460 = vunpack.c.l.s4 1983009808
      %v461 = vunpack.c.0.s8 %v460
      %v462 = vlaneseq
      %v463 = vshrl.u32 %v462, 7
      %v464 = vsub.s32 %v461, %v463
      %v465 = vrot.slane %v451, %v464
      %v466 = vcombine.low %v260, %v282
      %v467 = vcombine.high %v260, %v282
      %v469 = vunpack.c.l.s4 1983009808
      %v470 = vunpack.c.0.s8 %v469
      %v471 = vlaneseq
      %v472 = vshrl.u32 %v471, 7
      %v473 = vsub.s32 %v470, %v472
      %v474 = vrot.slane %v466, %v473
      %v476 = vunpack.c.l.s4 1983009808
      %v477 = vunpack.c.0.s8 %v476
      %v478 = vlaneseq
      %v479 = vshrl.u32 %v478, 7
      %v480 = vsub.s32 %v477, %v479
      %v481 = vrot.slane %v467, %v480
      %v482 = vcombine.low %v271, %v293
      %v483 = vcombine.high %v271, %v293
      %v485 = vunpack.c.l.s4 1983009808
      %v486 = vunpack.c.0.s8 %v485
      %v487 = vlaneseq
      %v488 = vshrl.u32 %v487, 7
      %v489 = vsub.s32 %v486, %v488
      %v490 = vrot.slane %v482, %v489
      %v492 = vunpack.c.l.s4 1983009808
      %v493 = vunpack.c.0.s8 %v492
      %v494 = vlaneseq
      %v495 = vshrl.u32 %v494, 7
      %v496 = vsub.s32 %v493, %v495
      %v497 = vrot.slane %v483, %v496
      %v498 = vcombine.low %v442, %v458
      %v499 = vcombine.high %v442, %v458
      %v501 = vunpack.c.l.s4 1934713408
      %v502 = vunpack.c.0.s8 %v501
      %v503 = vlaneseq
      %v504 = vshrl.u32 %v503, 7
      %v505 = vsub.s32 %v502, %v504
      %v506 = vrot.slane %v498, %v505
      %v508 = vunpack.c.l.s4 1934713408
      %v509 = vunpack.c.0.s8 %v508
      %v510 = vlaneseq
      %v511 = vshrl.u32 %v510, 7
      %v512 = vsub.s32 %v509, %v511
      %v513 = vrot.slane %v499, %v512
      %v514 = vcombine.low %v449, %v465
      %v515 = vcombine.high %v449, %v465
      %v517 = vunpack.c.l.s4 1934713408
      %v518 = vunpack.c.0.s8 %v517
      %v519 = vlaneseq
      %v520 = vshrl.u32 %v519, 7
      %v521 = vsub.s32 %v518, %v520
      %v522 = vrot.slane %v514, %v521
      %v524 = vunpack.c.l.s4 1934713408
      %v525 = vunpack.c.0.s8 %v524
      %v526 = vlaneseq
      %v527 = vshrl.u32 %v526, 7
      %v528 = vsub.s32 %v525, %v527
      %v529 = vrot.slane %v515, %v528
      %v530 = vcombine.low %v474, %v490
      %v531 = vcombine.high %v474, %v490
      %v533 = vunpack.c.l.s4 1934713408
      %v534 = vunpack.c.0.s8 %v533
      %v535 = vlaneseq
      %v536 = vshrl.u32 %v535, 7
      %v537 = vsub.s32 %v534, %v536
      %v538 = vrot.slane %v530, %v537
      %v540 = vunpack.c.l.s4 1934713408
      %v541 = vunpack.c.0.s8 %v540
      %v542 = vlaneseq
      %v543 = vshrl.u32 %v542, 7
      %v544 = vsub.s32 %v541, %v543
      %v545 = vrot.slane %v531, %v544
      %v546 = vcombine.low %v481, %v497
      %v547 = vcombine.high %v481, %v497
      %v549 = vunpack.c.l.s4 1934713408
      %v550 = vunpack.c.0.s8 %v549
      %v551 = vlaneseq
      %v552 = vshrl.u32 %v551, 7
      %v553 = vsub.s32 %v550, %v552
      %v554 = vrot.slane %v546, %v553
      %v556 = vunpack.c.l.s4 1934713408
      %v557 = vunpack.c.0.s8 %v556
      %v558 = vlaneseq
      %v559 = vshrl.u32 %v558, 7
      %v560 = vsub.s32 %v557, %v559
      %v561 = vrot.slane %v547, %v560
      %v562 = vcombine.low %v506, %v538
      %v563 = vcombine.high %v506, %v538
      %v564 = vcombine.low %v513, %v545
      %v565 = vcombine.high %v513, %v545
      %v566 = vcombine.low %v522, %v554
      %v567 = vcombine.high %v522, %v554
      %v568 = vcombine.low %v529, %v561
      %v569 = vcombine.high %v529, %v561
      %v570 = vcombine.low %v132, %v154
      %v571 = vcombine.high %v132, %v154
      %v573 = vunpack.c.l.s4 1983009808
      %v574 = vunpack.c.0.s8 %v573
      %v575 = vlaneseq
      %v576 = vshrl.u32 %v575, 7
      %v577 = vsub.s32 %v574, %v576
      %v578 = vrot.slane %v570, %v577
      %v580 = vunpack.c.l.s4 1983009808
      %v581 = vunpack.c.0.s8 %v580
      %v582 = vlaneseq
      %v583 = vshrl.u32 %v582, 7
      %v584 = vsub.s32 %v581, %v583
      %v585 = vrot.slane %v571, %v584
      %v586 = vcombine.low %v143, %v165
      %v587 = vcombine.high %v143, %v165
      %v589 = vunpack.c.l.s4 1983009808
      %v590 = vunpack.c.0.s8 %v589
      %v591 = vlaneseq
      %v592 = vshrl.u32 %v591, 7
      %v593 = vsub.s32 %v590, %v592
      %v594 = vrot.slane %v586, %v593
      %v596 = vunpack.c.l.s4 1983009808
      %v597 = vunpack.c.0.s8 %v596
      %v598 = vlaneseq
      %v599 = vshrl.u32 %v598, 7
      %v600 = vsub.s32 %v597, %v599
      %v601 = vrot.slane %v587, %v600
      %v602 = vcombine.low %v176, %v198
      %v603 = vcombine.high %v176, %v198
      %v605 = vunpack.c.l.s4 1983009808
      %v606 = vunpack.c.0.s8 %v605
      %v607 = vlaneseq
      %v608 = vshrl.u32 %v607, 7
      %v609 = vsub.s32 %v606, %v608
      %v610 = vrot.slane %v602, %v609
      %v612 = vunpack.c.l.s4 1983009808
      %v613 = vunpack.c.0.s8 %v612
      %v614 = vlaneseq
      %v615 = vshrl.u32 %v614, 7
      %v616 = vsub.s32 %v613, %v615
      %v617 = vrot.slane %v603, %v616
      %v618 = vcombine.low %v187, %v209
      %v619 = vcombine.high %v187, %v209
      %v621 = vunpack.c.l.s4 1983009808
      %v622 = vunpack.c.0.s8 %v621
      %v623 = vlaneseq
      %v624 = vshrl.u32 %v623, 7
      %v625 = vsub.s32 %v622, %v624
      %v626 = vrot.slane %v618, %v625
      %v628 = vunpack.c.l.s4 1983009808
      %v629 = vunpack.c.0.s8 %v628
      %v630 = vlaneseq
      %v631 = vshrl.u32 %v630, 7
      %v632 = vsub.s32 %v629, %v631
      %v633 = vrot.slane %v619, %v632
      %v634 = vcombine.low %v578, %v594
      %v635 = vcombine.high %v578, %v594
      %v637 = vunpack.c.l.s4 1934713408
      %v638 = vunpack.c.0.s8 %v637
      %v639 = vlaneseq
      %v640 = vshrl.u32 %v639, 7
      %v641 = vsub.s32 %v638, %v640
      %v642 = vrot.slane %v634, %v641
      %v644 = vunpack.c.l.s4 1934713408
      %v645 = vunpack.c.0.s8 %v644
      %v646 = vlaneseq
      %v647 = vshrl.u32 %v646, 7
      %v648 = vsub.s32 %v645, %v647
      %v649 = vrot.slane %v635, %v648
      %v650 = vcombine.low %v585, %v601
      %v651 = vcombine.high %v585, %v601
      %v653 = vunpack.c.l.s4 1934713408
      %v654 = vunpack.c.0.s8 %v653
      %v655 = vlaneseq
      %v656 = vshrl.u32 %v655, 7
      %v657 = vsub.s32 %v654, %v656
      %v658 = vrot.slane %v650, %v657
      %v660 = vunpack.c.l.s4 1934713408
      %v661 = vunpack.c.0.s8 %v660
      %v662 = vlaneseq
      %v663 = vshrl.u32 %v662, 7
      %v664 = vsub.s32 %v661, %v663
      %v665 = vrot.slane %v651, %v664
      %v666 = vcombine.low %v610, %v626
      %v667 = vcombine.high %v610, %v626
      %v669 = vunpack.c.l.s4 1934713408
      %v670 = vunpack.c.0.s8 %v669
      %v671 = vlaneseq
      %v672 = vshrl.u32 %v671, 7
      %v673 = vsub.s32 %v670, %v672
      %v674 = vrot.slane %v666, %v673
      %v676 = vunpack.c.l.s4 1934713408
      %v677 = vunpack.c.0.s8 %v676
      %v678 = vlaneseq
      %v679 = vshrl.u32 %v678, 7
      %v680 = vsub.s32 %v677, %v679
      %v681 = vrot.slane %v667, %v680
      %v682 = vcombine.low %v617, %v633
      %v683 = vcombine.high %v617, %v633
      %v685 = vunpack.c.l.s4 1934713408
      %v686 = vunpack.c.0.s8 %v685
      %v687 = vlaneseq
      %v688 = vshrl.u32 %v687, 7
      %v689 = vsub.s32 %v686, %v688
      %v690 = vrot.slane %v682, %v689
      %v692 = vunpack.c.l.s4 1934713408
      %v693 = vunpack.c.0.s8 %v692
      %v694 = vlaneseq
      %v695 = vshrl.u32 %v694, 7
      %v696 = vsub.s32 %v693, %v695
      %v697 = vrot.slane %v683, %v696
      %v698 = vcombine.low %v642, %v674
      %v699 = vcombine.high %v642, %v674
      %v700 = vcombine.low %v649, %v681
      %v701 = vcombine.high %v649, %v681
      %v702 = vcombine.low %v658, %v690
      %v703 = vcombine.high %v658, %v690
      %v704 = vcombine.low %v665, %v697
      %v705 = vcombine.high %v665, %v697
      %v706 = vcombine.low %v220, %v242
      %v707 = vcombine.high %v220, %v242
      %v709 = vunpack.c.l.s4 1983009808
      %v710 = vunpack.c.0.s8 %v709
      %v711 = vlaneseq
      %v712 = vshrl.u32 %v711, 7
      %v713 = vsub.s32 %v710, %v712
      %v714 = vrot.slane %v706, %v713
      %v716 = vunpack.c.l.s4 1983009808
      %v717 = vunpack.c.0.s8 %v716
      %v718 = vlaneseq
      %v719 = vshrl.u32 %v718, 7
      %v720 = vsub.s32 %v717, %v719
      %v721 = vrot.slane %v707, %v720
      %v722 = vcombine.low %v231, %v253
      %v723 = vcombine.high %v231, %v253
      %v725 = vunpack.c.l.s4 1983009808
      %v726 = vunpack.c.0.s8 %v725
      %v727 = vlaneseq
      %v728 = vshrl.u32 %v727, 7
      %v729 = vsub.s32 %v726, %v728
      %v730 = vrot.slane %v722, %v729
      %v732 = vunpack.c.l.s4 1983009808
      %v733 = vunpack.c.0.s8 %v732
      %v734 = vlaneseq
      %v735 = vshrl.u32 %v734, 7
      %v736 = vsub.s32 %v733, %v735
      %v737 = vrot.slane %v723, %v736
      %v738 = vcombine.low %v264, %v286
      %v739 = vcombine.high %v264, %v286
      %v741 = vunpack.c.l.s4 1983009808
      %v742 = vunpack.c.0.s8 %v741
      %v743 = vlaneseq
      %v744 = vshrl.u32 %v743, 7
      %v745 = vsub.s32 %v742, %v744
      %v746 = vrot.slane %v738, %v745
      %v748 = vunpack.c.l.s4 1983009808
      %v749 = vunpack.c.0.s8 %v748
      %v750 = vlaneseq
      %v751 = vshrl.u32 %v750, 7
      %v752 = vsub.s32 %v749, %v751
      %v753 = vrot.slane %v739, %v752
      %v754 = vcombine.low %v275, %v297
      %v755 = vcombine.high %v275, %v297
      %v757 = vunpack.c.l.s4 1983009808
      %v758 = vunpack.c.0.s8 %v757
      %v759 = vlaneseq
      %v760 = vshrl.u32 %v759, 7
      %v761 = vsub.s32 %v758, %v760
      %v762 = vrot.slane %v754, %v761
      %v764 = vunpack.c.l.s4 1983009808
      %v765 = vunpack.c.0.s8 %v764
      %v766 = vlaneseq
      %v767 = vshrl.u32 %v766, 7
      %v768 = vsub.s32 %v765, %v767
      %v769 = vrot.slane %v755, %v768
      %v770 = vcombine.low %v714, %v730
      %v771 = vcombine.high %v714, %v730
      %v773 = vunpack.c.l.s4 1934713408
      %v774 = vunpack.c.0.s8 %v773
      %v775 = vlaneseq
      %v776 = vshrl.u32 %v775, 7
      %v777 = vsub.s32 %v774, %v776
      %v778 = vrot.slane %v770, %v777
      %v780 = vunpack.c.l.s4 1934713408
      %v781 = vunpack.c.0.s8 %v780
      %v782 = vlaneseq
      %v783 = vshrl.u32 %v782, 7
      %v784 = vsub.s32 %v781, %v783
      %v785 = vrot.slane %v771, %v784
      %v786 = vcombine.low %v721, %v737
      %v787 = vcombine.high %v721, %v737
      %v789 = vunpack.c.l.s4 1934713408
      %v790 = vunpack.c.0.s8 %v789
      %v791 = vlaneseq
      %v792 = vshrl.u32 %v791, 7
      %v793 = vsub.s32 %v790, %v792
      %v794 = vrot.slane %v786, %v793
      %v796 = vunpack.c.l.s4 1934713408
      %v797 = vunpack.c.0.s8 %v796
      %v798 = vlaneseq
      %v799 = vshrl.u32 %v798, 7
      %v800 = vsub.s32 %v797, %v799
      %v801 = vrot.slane %v787, %v800
      %v802 = vcombine.low %v746, %v762
      %v803 = vcombine.high %v746, %v762
      %v805 = vunpack.c.l.s4 1934713408
      %v806 = vunpack.c.0.s8 %v805
      %v807 = vlaneseq
      %v808 = vshrl.u32 %v807, 7
      %v809 = vsub.s32 %v806, %v808
      %v810 = vrot.slane %v802, %v809
      %v812 = vunpack.c.l.s4 1934713408
      %v813 = vunpack.c.0.s8 %v812
      %v814 = vlaneseq
      %v815 = vshrl.u32 %v814, 7
      %v816 = vsub.s32 %v813, %v815
      %v817 = vrot.slane %v803, %v816
      %v818 = vcombine.low %v753, %v769
      %v819 = vcombine.high %v753, %v769
      %v821 = vunpack.c.l.s4 1934713408
      %v822 = vunpack.c.0.s8 %v821
      %v823 = vlaneseq
      %v824 = vshrl.u32 %v823, 7
      %v825 = vsub.s32 %v822, %v824
      %v826 = vrot.slane %v818, %v825
      %v828 = vunpack.c.l.s4 1934713408
      %v829 = vunpack.c.0.s8 %v828
      %v830 = vlaneseq
      %v831 = vshrl.u32 %v830, 7
      %v832 = vsub.s32 %v829, %v831
      %v833 = vrot.slane %v819, %v832
      %v834 = vcombine.low %v778, %v810
      %v835 = vcombine.high %v778, %v810
      %v836 = vcombine.low %v785, %v817
      %v837 = vcombine.high %v785, %v817
      %v838 = vcombine.low %v794, %v826
      %v839 = vcombine.high %v794, %v826
      %v840 = vcombine.low %v801, %v833
      %v841 = vcombine.high %v801, %v833
      %844 = vrot.lane.b32.xlu0 %v427, 2
      %v845 = vpop.permute.xlu0 %844
      %846 = vrot.lane.b32.xlu0 %v563, 2
      %v847 = vpop.permute.xlu0 %846
      %852 = vrot.lane.b32.xlu0 %v428, 4
      %v853 = vpop.permute.xlu0 %852
      %854 = vrot.lane.b32.xlu0 %v564, 4
      %v855 = vpop.permute.xlu0 %854
      %860 = vrot.lane.b32.xlu0 %v429, 6
      %v861 = vpop.permute.xlu0 %860
      %862 = vrot.lane.b32.xlu0 %v565, 6
      %v863 = vpop.permute.xlu0 %862
      %868 = vrot.lane.b32.xlu0 %v430, 8
      %v869 = vpop.permute.xlu0 %868
      %870 = vrot.lane.b32.xlu0 %v566, 8
      %v871 = vpop.permute.xlu0 %870
      %876 = vrot.lane.b32.xlu0 %v431, 10
      %v877 = vpop.permute.xlu0 %876
      %878 = vrot.lane.b32.xlu0 %v567, 10
      %v879 = vpop.permute.xlu0 %878
      %884 = vrot.lane.b32.xlu0 %v432, 12
      %v885 = vpop.permute.xlu0 %884
      %886 = vrot.lane.b32.xlu0 %v568, 12
      %v887 = vpop.permute.xlu0 %886
      %892 = vrot.lane.b32.xlu0 %v433, 14
      %v893 = vpop.permute.xlu0 %892
      %894 = vrot.lane.b32.xlu0 %v569, 14
      %v895 = vpop.permute.xlu0 %894
      %900 = vrot.lane.b32.xlu0 %v698, 16
      %v901 = vpop.permute.xlu0 %900
      %902 = vrot.lane.b32.xlu0 %v834, 16
      %v903 = vpop.permute.xlu0 %902
      %908 = vrot.lane.b32.xlu0 %v699, 18
      %v909 = vpop.permute.xlu0 %908
      %910 = vrot.lane.b32.xlu0 %v835, 18
      %v911 = vpop.permute.xlu0 %910
      %916 = vrot.lane.b32.xlu0 %v700, 20
      %v917 = vpop.permute.xlu0 %916
      %918 = vrot.lane.b32.xlu0 %v836, 20
      %v919 = vpop.permute.xlu0 %918
      %924 = vrot.lane.b32.xlu0 %v701, 22
      %v925 = vpop.permute.xlu0 %924
      %926 = vrot.lane.b32.xlu0 %v837, 22
      %v927 = vpop.permute.xlu0 %926
      %932 = vrot.lane.b32.xlu0 %v702, 24
      %v933 = vpop.permute.xlu0 %932
      %934 = vrot.lane.b32.xlu0 %v838, 24
      %v935 = vpop.permute.xlu0 %934
      %940 = vrot.lane.b32.xlu0 %v703, 26
      %v941 = vpop.permute.xlu0 %940
      %942 = vrot.lane.b32.xlu0 %v839, 26
      %v943 = vpop.permute.xlu0 %942
      %948 = vrot.lane.b32.xlu0 %v704, 28
      %v949 = vpop.permute.xlu0 %948
      %950 = vrot.lane.b32.xlu0 %v840, 28
      %v951 = vpop.permute.xlu0 %950
      %956 = vrot.lane.b32.xlu0 %v705, 30
      %v957 = vpop.permute.xlu0 %956
      %958 = vrot.lane.b32.xlu0 %v841, 30
      %v959 = vpop.permute.xlu0 %958
      %vm962 = vcmask 15360
      %v963 = vsel %vm962, %v426, %v845
      %v964 = vsel %vm962, %v562, %v847
      %vm965 = vcmask 31744
      %v966 = vsel %vm965, %v963, %v853
      %v967 = vsel %vm965, %v964, %v855
      %vm968 = vcmask 48128
      %v969 = vsel %vm968, %v966, %v861
      %v970 = vsel %vm968, %v967, %v863
      %vm971 = vcmask 64512
      %v972 = vsel %vm971, %v969, %v869
      %v973 = vsel %vm971, %v970, %v871
      %vm974 = vcmask 80896
      %v975 = vsel %vm974, %v972, %v877
      %v976 = vsel %vm974, %v973, %v879
      %vm977 = vcmask 97280
      %v978 = vsel %vm977, %v975, %v885
      %v979 = vsel %vm977, %v976, %v887
      %vm980 = vcmask 113664
      %v981 = vsel %vm980, %v978, %v893
      %v982 = vsel %vm980, %v979, %v895
      %vm983 = vcmask 130048
      %v984 = vsel %vm983, %v981, %v901
      %v985 = vsel %vm983, %v982, %v903
      %vm986 = vcmask 146432
      %v987 = vsel %vm986, %v984, %v909
      %v988 = vsel %vm986, %v985, %v911
      %vm989 = vcmask 162816
      %v990 = vsel %vm989, %v987, %v917
      %v991 = vsel %vm989, %v988, %v919
      %vm992 = vcmask 179200
      %v993 = vsel %vm992, %v990, %v925
      %v994 = vsel %vm992, %v991, %v927
      %vm995 = vcmask 195584
      %v996 = vsel %vm995, %v993, %v933
      %v997 = vsel %vm995, %v994, %v935
      %vm998 = vcmask 211968
      %v999 = vsel %vm998, %v996, %v941
      %v1000 = vsel %vm998, %v997, %v943
      %vm1001 = vcmask 228352
      %v1002 = vsel %vm1001, %v999, %v949
      %v1003 = vsel %vm1001, %v1000, %v951
      %vm1004 = vcmask 244736
      %v1005 = vsel %vm1004, %v1002, %v957
      %v1006 = vsel %vm1004, %v1003, %v959
      %1009 = vrot.lane.b32.xlu0 %v1005, 32
      %v1010 = vpop.permute.xlu0 %1009
      %1011 = vrot.lane.b32.xlu0 %v1006, 32
      %v1012 = vpop.permute.xlu0 %1011
      %vm1015 = vcmask 261120
      %v1016 = vsel %vm1015, %v1005, %v1010
      %v1017 = vsel %vm1015, %v1006, %v1012
      %vm1018 = vcmask 523264
      %1019 = vst.msk [vmem:[%s118] sm:$0xff] %vm1018, %v1016
      %1020 = vst.msk [vmem:[%s118 + $0x8] sm:$0xff] %vm1018, %v1017
      %s1021 = smul.u32 2, %s12
      %p1022 = scmp.lt.s32.totalorder %s1021, 15
      %s1023 = scalar_select %p1022, %s1021, 15
      %s1024 = smul.addr %s1023, 8
      %s1025 = scalar_lea.vmem %s1, %s1024
      // Predicated region
      $region25: #{tpu_custom_call.1} parent=23 // pred_check
        %p1026 = pneg %p56
      $region26: #{tpu_custom_call.1} parent=23 // pred_check_branch
        %1028 = sbr.rel (%p1026) target = $region28
      $region27: #{tpu_custom_call.1} parent=23 // pred_region
        %s1029 = smul.u32 2, %s12
      $region28: #{tpu_custom_call.1} parent=23 // pred_fallthru
        _
    $region24: #{tpu_custom_call.1} parent=5 // pred_fallthru
      _
    %p1030 = scmp.le.s32.totalorder 2, %s7
    // Predicated region
    $region29: #{tpu_custom_call.1} parent=5 // pred_check
      %p1031 = pneg %p1030
    $region30: #{tpu_custom_call.1} parent=5 // pred_check_branch
      %1033 = sbr.rel (%p1031) target = $region32
    $region31: #{tpu_custom_call.1} parent=5 // pred_region
      %s1034 = ssub.s32 %s7, 2
      // Predicated region
      $region33: #{tpu_custom_call.1} parent=31 // pred_check
        %p1035 = pneg %p62
      $region34: #{tpu_custom_call.1} parent=31 // pred_check_branch
        %1037 = sbr.rel (%p1035) target = $region36
      $region35: #{tpu_custom_call.1} parent=31 // pred_region
        %s1038 = smul.u32 2, %s13
        %p1039 = scmp.lt.s32.totalorder %s1038, 15
        %s1040 = scalar_select %p1039, %s1038, 15
        %s1041 = smul.addr %s1040, 8
        %s1042 = scalar_lea.vmem %s1, %s1041
      $region36: #{tpu_custom_call.1} parent=31 // pred_fallthru
        _
    $region32: #{tpu_custom_call.1} parent=5 // pred_fallthru
      _
  $region6: #{tpu_custom_call.1} parent=0 // loop_footer
    %s11 = sadd.s32 1, %s7
  $region7: #{tpu_custom_call.1} parent=0 // loop_footer_branch
    %6 = sbr.rel target = $region3
  $region8: #{tpu_custom_call.1} parent=0 // loop_exit
    _

</llo_original>
